<compile_context>
chip_gen: v7x
topology: tpu7x:2x2x1
jax: 0.10.0
libtpu: 0.0.40
codegen_flags: <defaults>
</compile_context>

<pallas_src>
import jax
import jax.numpy as jnp
from jax.experimental import pallas as pl
from jax.experimental.pallas import tpu as pltpu

N_PAD = 128  # lane-dense output width (>= 2 * n_actions)


def actor_kernel(x_ref,
                 w1_ref, b1_ref,
                 w2_ref, b2_ref,
                 w3_ref, b3_ref,
                 wh_ref, bh_ref,
                 out_ref):
    """3x tanh MLP layers + fused (alpha|beta) head with relu(.)+1 epilogue."""
    # x arrives already in bf16 (cast in the wrapper); MXU runs bf16 inputs
    # with f32 accumulation; bias add / tanh / relu stay f32 (v5e EUP/VPU
    # have no bf16 path and accuracy is better).
    x = x_ref[...]
    h = jnp.tanh(jnp.dot(x, w1_ref[...],
                         preferred_element_type=jnp.float32) + b1_ref[...])
    h = jnp.tanh(jnp.dot(h.astype(jnp.bfloat16), w2_ref[...],
                         preferred_element_type=jnp.float32) + b2_ref[...])
    h = jnp.tanh(jnp.dot(h.astype(jnp.bfloat16), w3_ref[...],
                         preferred_element_type=jnp.float32) + b3_ref[...])
    heads = jnp.dot(h.astype(jnp.bfloat16), wh_ref[...],
                    preferred_element_type=jnp.float32) + bh_ref[...]
    # relu(.) + beta_constant (=1.0) for both alpha and beta halves at once.
    # Padded (zero-weight/zero-bias) lanes become 1.0 and are sliced off.
    out_ref[...] = jnp.maximum(heads, 0.0) + 1.0


def prepare_actor_params(params):
    """One-time kernel-ready packing: fuse + lane-pad the head, cast to bf16.

    Do this once per parameter update, NOT per forward call.
    """
    n_actions = params["wa"].shape[1]
    n_out = 2 * n_actions
    assert n_out <= N_PAD, "head wider than one lane-dense tile"

    wh = jnp.concatenate([params["wa"], params["wb"]], axis=1)   # (hidden, n_out)
    bh = jnp.concatenate([params["ba"], params["bb"]], axis=1)   # (1, n_out)
    # Zero-pad the fused head to 128 columns -> unmasked lane-dense store.
    wh = jnp.pad(wh, ((0, 0), (0, N_PAD - n_out)))
    bh = jnp.pad(bh, ((0, 0), (0, N_PAD - n_out)))

    bf16 = lambda w: w.astype(jnp.bfloat16)
    prep = {
        "w1": bf16(params["w1"]), "b1": params["b1"],
        "w2": bf16(params["w2"]), "b2": params["b2"],
        "w3": bf16(params["w3"]), "b3": params["b3"],
        "wh": bf16(wh), "bh": bh,
        "n_actions": n_actions,
    }
    return prep


def actor_forward(state, prep, *, block_rows=None):
    """Fused actor forward. Returns (alpha, beta) Beta concentration params.

    `prep` must come from `prepare_actor_params` (weights already bf16, head
    already fused + padded) so no per-call weight-prep XLA ops are emitted.
    """
    batch, in_dim = state.shape
    hidden = prep["w1"].shape[1]
    n_actions = prep["n_actions"]
    n_out = 2 * n_actions

    # Grid-step choice: one step for typical batches (grid is a serial loop on
    # v5e/v6e and per-step overhead dominates this tiny kernel); only tile the
    # batch for large inputs, where the "parallel" axis also lets v7x use both
    # TensorCores. VMEM capacity is irrelevant at these tile sizes.
    padded8 = ((batch + 7) // 8) * 8
    if block_rows is None:
        bm = padded8 if padded8 <= 1024 else 512
    else:
        bm = max(8, ((min(block_rows, padded8) + 7) // 8) * 8)
    padded = ((batch + bm - 1) // bm) * bm
    grid_m = padded // bm

    # Stream x in bf16 (it is the only batch-scaling tensor); pad rows to bm.
    x = state.astype(jnp.bfloat16)
    if padded != batch:
        x = jnp.pad(x, ((0, padded - batch), (0, 0)))

    vmem = pltpu.MemorySpace.VMEM
    row_spec = lambda cols: pl.BlockSpec((bm, cols), lambda i: (i, 0),
                                         memory_space=vmem)
    fix_spec = lambda r, c: pl.BlockSpec((r, c), lambda i: (0, 0),
                                         memory_space=vmem)

    w1, b1 = prep["w1"], prep["b1"]
    w2, b2 = prep["w2"], prep["b2"]
    w3, b3 = prep["w3"], prep["b3"]
    wh, bh = prep["wh"], prep["bh"]

    cost = pl.CostEstimate(
        flops=2 * padded * (in_dim * hidden + 2 * hidden * hidden
                            + hidden * N_PAD),
        transcendentals=3 * padded * hidden,
        bytes_accessed=(x.size * 2                       # bf16 input
                        + padded * N_PAD * 4             # f32 lane-dense output
                        + (w1.size + w2.size + w3.size + wh.size) * 2
                        + (b1.size + b2.size + b3.size + bh.size) * 4),
    )

    out = pl.pallas_call(
        actor_kernel,
        out_shape=jax.ShapeDtypeStruct((padded, N_PAD), jnp.float32),
        grid_spec=pltpu.PrefetchScalarGridSpec(
            num_scalar_prefetch=0,
            grid=(grid_m,),
            in_specs=[
                row_spec(in_dim),              # x  (bf16)
                fix_spec(in_dim, hidden),      # w1 (bf16)
                fix_spec(1, hidden),           # b1 (f32)
                fix_spec(hidden, hidden),      # w2
                fix_spec(1, hidden),           # b2
                fix_spec(hidden, hidden),      # w3
                fix_spec(1, hidden),           # b3
                fix_spec(hidden, N_PAD),       # wh (alpha|beta fused, lane-padded)
                fix_spec(1, N_PAD),            # bh
            ],
            out_specs=row_spec(N_PAD),
        ),
        compiler_params=pltpu.CompilerParams(
            dimension_semantics=("parallel",)),   # v7x: split batch over 2 TCs
        cost_estimate=cost,
    )(x, w1, b1, w2, b2, w3, b3, wh, bh)

    alpha = out[:batch, :n_actions]
    beta = out[:batch, n_actions:n_out]
    # TODO(synk): torch.distributions.Beta has no Pallas equivalent; return the
    # (alpha, beta) concentration parameters instead of a distribution object.
    return alpha, beta


def init_actor_params(key, input_dim, hidden, n_actions):
    """Deterministic synthetic parameter init (PyTorch-Linear-like uniform)."""
    def linear(k, fan_in, fan_out):
        kw, kb = jax.random.split(k)
        bound = 1.0 / jnp.sqrt(jnp.float32(fan_in))
        # Stored as (in, out): transpose of torch's (out, in) layout.
        w = jax.random.uniform(kw, (fan_in, fan_out), jnp.float32, -bound, bound)
        b = jax.random.uniform(kb, (1, fan_out), jnp.float32, -bound, bound)
        return w, b

    k1, k2, k3, ka, kb = jax.random.split(key, 5)
    w1, b1 = linear(k1, input_dim, hidden)
    w2, b2 = linear(k2, hidden, hidden)
    w3, b3 = linear(k3, hidden, hidden)
    wa, ba = linear(ka, hidden, n_actions)
    wb, bb = linear(kb, hidden, n_actions)
    return {"w1": w1, "b1": b1, "w2": w2, "b2": b2, "w3": w3, "b3": b3,
            "wa": wa, "ba": ba, "wb": wb, "bb": bb}


def _reference(state, params):
    h = jnp.tanh(state @ params["w1"] + params["b1"])
    h = jnp.tanh(h @ params["w2"] + params["b2"])
    h = jnp.tanh(h @ params["w3"] + params["b3"])
    alpha = jnp.maximum(h @ params["wa"] + params["ba"], 0.0) + 1.0
    beta = jnp.maximum(h @ params["wb"] + params["bb"], 0.0) + 1.0
    return alpha, beta


if __name__ == "__main__":
    key = jax.random.PRNGKey(0)
    k_params, k_state = jax.random.split(key)

    input_dim = 8       # input_dimensions = (8,)
    hidden = 64
    n_actions = 4       # number_of_actions

    params = init_actor_params(k_params, input_dim, hidden, n_actions)
    prep = prepare_actor_params(params)   # one-time kernel-ready packing

    # Case 1: batch=256, default tiling -> single grid step, weights resident.
    state = jax.random.normal(k_state, (256, input_dim), jnp.float32)
    alpha, beta = actor_forward(state, prep)
    jax.block_until_ready((alpha, beta))

    ref_alpha, ref_beta = _reference(state, params)
    # bf16 MXU inputs with f32 accumulation -> modest tolerance vs f32 ref.
    assert alpha.shape == (256, n_actions) and beta.shape == (256, n_actions)
    assert jnp.allclose(alpha, ref_alpha, atol=5e-2, rtol=5e-2)
    assert jnp.allclose(beta, ref_beta, atol=5e-2, rtol=5e-2)
    assert bool(jnp.all(alpha >= 1.0)) and bool(jnp.all(beta >= 1.0))

    # Case 2: tiny batch (single step, minimal padding).
    small = jax.random.normal(jax.random.PRNGKey(1), (8, input_dim), jnp.float32)
    a2, b2 = actor_forward(small, prep)
    jax.block_until_ready((a2, b2))
    ra2, rb2 = _reference(small, params)
    assert a2.shape == (8, n_actions) and b2.shape == (8, n_actions)
    assert jnp.allclose(a2, ra2, atol=5e-2, rtol=5e-2)
    assert jnp.allclose(b2, rb2, atol=5e-2, rtol=5e-2)

    # Case 3: odd batch (exercises row padding) ...
    odd = jax.random.normal(jax.random.PRNGKey(2), (5, input_dim), jnp.float32)
    a3, b3 = actor_forward(odd, prep)
    jax.block_until_ready((a3, b3))
    ra3, rb3 = _reference(odd, params)
    assert a3.shape == (5, n_actions)
    assert jnp.allclose(a3, ra3, atol=5e-2, rtol=5e-2)
    assert jnp.allclose(b3, rb3, atol=5e-2, rtol=5e-2)

    # Case 4: forced multi-step grid (block_rows=64 -> 4 steps) still correct.
    a4, b4 = actor_forward(state, prep, block_rows=64)
    jax.block_until_ready((a4, b4))
    assert jnp.allclose(a4, ref_alpha, atol=5e-2, rtol=5e-2)
    assert jnp.allclose(b4, ref_beta, atol=5e-2, rtol=5e-2)

    print("KERNEL_OK")
</pallas_src>

<mosaic_0001>
module attributes {stable_mosaic.version = 11 : i64} {
  func.func @actor_kernel(%arg0: i32, %arg1: memref<256x8xbf16, #tpu.memory_space<vmem>>, %arg2: memref<8x64xbf16, #tpu.memory_space<vmem>>, %arg3: memref<1x64xf32, #tpu.memory_space<vmem>>, %arg4: memref<64x64xbf16, #tpu.memory_space<vmem>>, %arg5: memref<1x64xf32, #tpu.memory_space<vmem>>, %arg6: memref<64x64xbf16, #tpu.memory_space<vmem>>, %arg7: memref<1x64xf32, #tpu.memory_space<vmem>>, %arg8: memref<64x128xbf16, #tpu.memory_space<vmem>>, %arg9: memref<1x128xf32, #tpu.memory_space<vmem>>, %arg10: memref<256x128xf32, #tpu.memory_space<vmem>>) attributes {dimension_semantics = [#tpu.dimension_semantics<parallel>], iteration_bounds = array<i64: 1>, scalar_prefetch = 0 : i64, scratch_operands = 0 : i64, tpu.core_type = #tpu.core_type<tc>, window_params = [{transform_indices = @transform_0, window_bounds = array<i64: 256, 8>}, {pipeline_mode = #tpu.pipeline_mode<synchronous>, transform_indices = @transform_1, window_bounds = array<i64: 8, 64>}, {pipeline_mode = #tpu.pipeline_mode<synchronous>, transform_indices = @transform_2, window_bounds = array<i64: 1, 64>}, {pipeline_mode = #tpu.pipeline_mode<synchronous>, transform_indices = @transform_3, window_bounds = array<i64: 64, 64>}, {pipeline_mode = #tpu.pipeline_mode<synchronous>, transform_indices = @transform_4, window_bounds = array<i64: 1, 64>}, {pipeline_mode = #tpu.pipeline_mode<synchronous>, transform_indices = @transform_5, window_bounds = array<i64: 64, 64>}, {pipeline_mode = #tpu.pipeline_mode<synchronous>, transform_indices = @transform_6, window_bounds = array<i64: 1, 64>}, {pipeline_mode = #tpu.pipeline_mode<synchronous>, transform_indices = @transform_7, window_bounds = array<i64: 64, 128>}, {pipeline_mode = #tpu.pipeline_mode<synchronous>, transform_indices = @transform_8, window_bounds = array<i64: 1, 128>}, {transform_indices = @transform_9, window_bounds = array<i64: 256, 128>}]} {
    %c0 = arith.constant 0 : index
    %c0_0 = arith.constant 0 : index
    %0 = vector.load %arg1[%c0, %c0_0] : memref<256x8xbf16, #tpu.memory_space<vmem>>, vector<256x8xbf16>
    %c0_1 = arith.constant 0 : index
    %c0_2 = arith.constant 0 : index
    %1 = vector.load %arg2[%c0_1, %c0_2] : memref<8x64xbf16, #tpu.memory_space<vmem>>, vector<8x64xbf16>
    %cst = arith.constant dense<0.000000e+00> : vector<256x64xf32>
    %2 = tpu.matmul %0, %1, %cst {dimension_numbers = #tpu.dot_dimension_numbers<[1], [0], [0], [1], [0, 0, 1, 1], [], []>} : vector<256x8xbf16>, vector<8x64xbf16>, vector<256x64xf32> -> vector<256x64xf32>
    %c0_3 = arith.constant 0 : index
    %c0_4 = arith.constant 0 : index
    %3 = vector.load %arg3[%c0_3, %c0_4] : memref<1x64xf32, #tpu.memory_space<vmem>>, vector<1x64xf32>
    %4 = vector.broadcast %3 : vector<1x64xf32> to vector<256x64xf32>
    %5 = arith.addf %2, %4 : vector<256x64xf32>
    %6 = math.tanh %5 : vector<256x64xf32>
    %7 = arith.truncf %6 : vector<256x64xf32> to vector<256x64xbf16>
    %c0_5 = arith.constant 0 : index
    %c0_6 = arith.constant 0 : index
    %8 = vector.load %arg4[%c0_5, %c0_6] : memref<64x64xbf16, #tpu.memory_space<vmem>>, vector<64x64xbf16>
    %cst_7 = arith.constant dense<0.000000e+00> : vector<256x64xf32>
    %9 = tpu.matmul %7, %8, %cst_7 {dimension_numbers = #tpu.dot_dimension_numbers<[1], [0], [0], [1], [0, 0, 1, 1], [], []>} : vector<256x64xbf16>, vector<64x64xbf16>, vector<256x64xf32> -> vector<256x64xf32>
    %c0_8 = arith.constant 0 : index
    %c0_9 = arith.constant 0 : index
    %10 = vector.load %arg5[%c0_8, %c0_9] : memref<1x64xf32, #tpu.memory_space<vmem>>, vector<1x64xf32>
    %11 = vector.broadcast %10 : vector<1x64xf32> to vector<256x64xf32>
    %12 = arith.addf %9, %11 : vector<256x64xf32>
    %13 = math.tanh %12 : vector<256x64xf32>
    %14 = arith.truncf %13 : vector<256x64xf32> to vector<256x64xbf16>
    %c0_10 = arith.constant 0 : index
    %c0_11 = arith.constant 0 : index
    %15 = vector.load %arg6[%c0_10, %c0_11] : memref<64x64xbf16, #tpu.memory_space<vmem>>, vector<64x64xbf16>
    %cst_12 = arith.constant dense<0.000000e+00> : vector<256x64xf32>
    %16 = tpu.matmul %14, %15, %cst_12 {dimension_numbers = #tpu.dot_dimension_numbers<[1], [0], [0], [1], [0, 0, 1, 1], [], []>} : vector<256x64xbf16>, vector<64x64xbf16>, vector<256x64xf32> -> vector<256x64xf32>
    %c0_13 = arith.constant 0 : index
    %c0_14 = arith.constant 0 : index
    %17 = vector.load %arg7[%c0_13, %c0_14] : memref<1x64xf32, #tpu.memory_space<vmem>>, vector<1x64xf32>
    %18 = vector.broadcast %17 : vector<1x64xf32> to vector<256x64xf32>
    %19 = arith.addf %16, %18 : vector<256x64xf32>
    %20 = math.tanh %19 : vector<256x64xf32>
    %21 = arith.truncf %20 : vector<256x64xf32> to vector<256x64xbf16>
    %c0_15 = arith.constant 0 : index
    %c0_16 = arith.constant 0 : index
    %22 = vector.load %arg8[%c0_15, %c0_16] : memref<64x128xbf16, #tpu.memory_space<vmem>>, vector<64x128xbf16>
    %cst_17 = arith.constant dense<0.000000e+00> : vector<256x128xf32>
    %23 = tpu.matmul %21, %22, %cst_17 {dimension_numbers = #tpu.dot_dimension_numbers<[1], [0], [0], [1], [0, 0, 1, 1], [], []>} : vector<256x64xbf16>, vector<64x128xbf16>, vector<256x128xf32> -> vector<256x128xf32>
    %c0_18 = arith.constant 0 : index
    %c0_19 = arith.constant 0 : index
    %24 = vector.load %arg9[%c0_18, %c0_19] : memref<1x128xf32, #tpu.memory_space<vmem>>, vector<1x128xf32>
    %25 = vector.broadcast %24 : vector<1x128xf32> to vector<256x128xf32>
    %26 = arith.addf %23, %25 : vector<256x128xf32>
    %cst_20 = arith.constant 0.000000e+00 : f32
    %27 = vector.broadcast %cst_20 : f32 to vector<256x128xf32>
    %28 = arith.maximumf %26, %27 : vector<256x128xf32>
    %cst_21 = arith.constant 1.000000e+00 : f32
    %29 = vector.broadcast %cst_21 : f32 to vector<256x128xf32>
    %30 = arith.addf %28, %29 : vector<256x128xf32>
    %c0_22 = arith.constant 0 : index
    %c0_23 = arith.constant 0 : index
    %31 = vector.load %arg10[%c0_22, %c0_23] : memref<256x128xf32, #tpu.memory_space<vmem>>, vector<256x128xf32>
    tpu.vector_store %arg10[%c0_22, %c0_23], %30 {strides = array<i32>} : memref<256x128xf32, #tpu.memory_space<vmem>>, vector<256x128xf32>,
    return
  }
  func.func @transform_0(%arg0: i32) -> (i32, i32) {
    %c0_i32 = arith.constant 0 : i32
    %c0_i32_0 = arith.constant 0 : i32
    return %arg0, %c0_i32 : i32, i32
  }
  func.func @transform_1(%arg0: i32) -> (i32, i32) {
    %c0_i32 = arith.constant 0 : i32
    %c0_i32_0 = arith.constant 0 : i32
    %c0_i32_1 = arith.constant 0 : i32
    return %c0_i32, %c0_i32_0 : i32, i32
  }
  func.func @transform_2(%arg0: i32) -> (i32, i32) {
    %c0_i32 = arith.constant 0 : i32
    %c0_i32_0 = arith.constant 0 : i32
    %c0_i32_1 = arith.constant 0 : i32
    return %c0_i32, %c0_i32_0 : i32, i32
  }
  func.func @transform_3(%arg0: i32) -> (i32, i32) {
    %c0_i32 = arith.constant 0 : i32
    %c0_i32_0 = arith.constant 0 : i32
    %c0_i32_1 = arith.constant 0 : i32
    return %c0_i32, %c0_i32_0 : i32, i32
  }
  func.func @transform_4(%arg0: i32) -> (i32, i32) {
    %c0_i32 = arith.constant 0 : i32
    %c0_i32_0 = arith.constant 0 : i32
    %c0_i32_1 = arith.constant 0 : i32
    return %c0_i32, %c0_i32_0 : i32, i32
  }
  func.func @transform_5(%arg0: i32) -> (i32, i32) {
    %c0_i32 = arith.constant 0 : i32
    %c0_i32_0 = arith.constant 0 : i32
    %c0_i32_1 = arith.constant 0 : i32
    return %c0_i32, %c0_i32_0 : i32, i32
  }
  func.func @transform_6(%arg0: i32) -> (i32, i32) {
    %c0_i32 = arith.constant 0 : i32
    %c0_i32_0 = arith.constant 0 : i32
    %c0_i32_1 = arith.constant 0 : i32
    return %c0_i32, %c0_i32_0 : i32, i32
  }
  func.func @transform_7(%arg0: i32) -> (i32, i32) {
    %c0_i32 = arith.constant 0 : i32
    %c0_i32_0 = arith.constant 0 : i32
    %c0_i32_1 = arith.constant 0 : i32
    return %c0_i32, %c0_i32_0 : i32, i32
  }
  func.func @transform_8(%arg0: i32) -> (i32, i32) {
    %c0_i32 = arith.constant 0 : i32
    %c0_i32_0 = arith.constant 0 : i32
    %c0_i32_1 = arith.constant 0 : i32
    return %c0_i32, %c0_i32_0 : i32, i32
  }
  func.func @transform_9(%arg0: i32) -> (i32, i32) {
    %c0_i32 = arith.constant 0 : i32
    %c0_i32_0 = arith.constant 0 : i32
    return %arg0, %c0_i32 : i32, i32
  }
}

</mosaic_0001>

<llo_original>
// kernel: tpu_custom_call.1
$region0: #{tpu_custom_call.1}
  #allocation0 [shape = 'u32[]', space=smem, size = 0x4, offset = 0x4, fixed_abs, tag = 'smem constant byte address 0x4 - core index']
  #allocation1 [shape = 'u32[144,128]{1,0:T(1,128)}', space=vmem, size = 0x12000, scoped, tag = 'internal scratch']
  %s0 = inlined_call_operand.vmem [shape: bf16[256,8], index: 0, kind: input, shape index: {}]
  %s1 = inlined_call_operand.vmem [shape: bf16[8,64], index: 1, kind: input, shape index: {}]
  %s2 = inlined_call_operand.vmem [shape: f32[1,64], index: 2, kind: input, shape index: {}]
  %s3 = inlined_call_operand.vmem [shape: bf16[64,64], index: 3, kind: input, shape index: {}]
  %s4 = inlined_call_operand.vmem [shape: f32[1,64], index: 4, kind: input, shape index: {}]
  %s5 = inlined_call_operand.vmem [shape: bf16[64,64], index: 5, kind: input, shape index: {}]
  %s6 = inlined_call_operand.vmem [shape: f32[1,64], index: 6, kind: input, shape index: {}]
  %s7 = inlined_call_operand.vmem [shape: bf16[64,128], index: 7, kind: input, shape index: {}]
  %s8 = inlined_call_operand.vmem [shape: f32[1,128], index: 8, kind: input, shape index: {}]
  %s9 = inlined_call_operand.hbm [shape: f32[256,128], index: 9, kind: output, shape index: {}]
  %s10 = sld [smem:[#allocation0]]
  $region46: #{tpu_custom_call.1} parent=0
    _
  %s12 = ssub.s32 1, %s10
  %s13 = scalar_select 0, %s12, %s10
  $region1: #{tpu_custom_call.1} parent=0
    #allocation2 [shape = 'u8[131072]{0}', space=vmem, size = 0x20000, scoped, tag = 'output window, operand 0, single buffered']
    #allocation3 [shape = 's32[1]{0}', space=sflag, size = 0x4, scoped, tag = 'scoped memory for tpu_custom_call.1']
    %14 = vsyncpa [#allocation3], 0
    // Predicated region
    $region2: #{tpu_custom_call.1} parent=1 // pred_check
      _
    $region3: #{tpu_custom_call.1} parent=1 // pred_check_branch
      %16 = sbr.rel (0) target = $region5
    $region4: #{tpu_custom_call.1} parent=1 // pred_region
      _
    $region5: #{tpu_custom_call.1} parent=1 // pred_fallthru
      _
    // Predicated region
    $region6: #{tpu_custom_call.1} parent=1 // pred_check
      _
    $region7: #{tpu_custom_call.1} parent=1 // pred_check_branch
      %18 = sbr.rel (0) target = $region9
    $region8: #{tpu_custom_call.1} parent=1 // pred_region
      _
    $region9: #{tpu_custom_call.1} parent=1 // pred_fallthru
      _
    // Predicated region
    $region10: #{tpu_custom_call.1} parent=1 // pred_check
      _
    $region11: #{tpu_custom_call.1} parent=1 // pred_check_branch
      %20 = sbr.rel (0) target = $region13
    $region12: #{tpu_custom_call.1} parent=1 // pred_region
      _
    $region13: #{tpu_custom_call.1} parent=1 // pred_fallthru
      _
    // Predicated region
    $region14: #{tpu_custom_call.1} parent=1 // pred_check
      _
    $region15: #{tpu_custom_call.1} parent=1 // pred_check_branch
      %22 = sbr.rel (0) target = $region17
    $region16: #{tpu_custom_call.1} parent=1 // pred_region
      _
    $region17: #{tpu_custom_call.1} parent=1 // pred_fallthru
      _
    // Predicated region
    $region18: #{tpu_custom_call.1} parent=1 // pred_check
      _
    $region19: #{tpu_custom_call.1} parent=1 // pred_check_branch
      %24 = sbr.rel (0) target = $region21
    $region20: #{tpu_custom_call.1} parent=1 // pred_region
      _
    $region21: #{tpu_custom_call.1} parent=1 // pred_fallthru
      _
    // Predicated region
    $region22: #{tpu_custom_call.1} parent=1 // pred_check
      _
    $region23: #{tpu_custom_call.1} parent=1 // pred_check_branch
      %26 = sbr.rel (0) target = $region25
    $region24: #{tpu_custom_call.1} parent=1 // pred_region
      _
    $region25: #{tpu_custom_call.1} parent=1 // pred_fallthru
      _
    // Predicated region
    $region26: #{tpu_custom_call.1} parent=1 // pred_check
      _
    $region27: #{tpu_custom_call.1} parent=1 // pred_check_branch
      %28 = sbr.rel (0) target = $region29
    $region28: #{tpu_custom_call.1} parent=1 // pred_region
      _
    $region29: #{tpu_custom_call.1} parent=1 // pred_fallthru
      _
    // Predicated region
    $region30: #{tpu_custom_call.1} parent=1 // pred_check
      _
    $region31: #{tpu_custom_call.1} parent=1 // pred_check_branch
      %30 = sbr.rel (0) target = $region33
    $region32: #{tpu_custom_call.1} parent=1 // pred_region
      _
    $region33: #{tpu_custom_call.1} parent=1 // pred_fallthru
      _
    // Predicated region
    $region34: #{tpu_custom_call.1} parent=1 // pred_check
      _
    $region35: #{tpu_custom_call.1} parent=1 // pred_check_branch
      %32 = sbr.rel (0) target = $region37
    $region36: #{tpu_custom_call.1} parent=1 // pred_region
      _
    $region37: #{tpu_custom_call.1} parent=1 // pred_fallthru
      _
    %v34 = vld [vmem:[%s0] sm:$0xf]
    %v35 = vld [vmem:[%s0 + $0x4] sm:$0xf]
    %v36 = vld [vmem:[%s0 + $0x8] sm:$0xf]
    %v37 = vld [vmem:[%s0 + $0xc] sm:$0xf]
    %v38 = vld [vmem:[%s0 + $0x10] sm:$0xf]
    %v39 = vld [vmem:[%s0 + $0x14] sm:$0xf]
    %v40 = vld [vmem:[%s0 + $0x18] sm:$0xf]
    %v41 = vld [vmem:[%s0 + $0x1c] sm:$0xf]
    %v42 = vld [vmem:[%s0 + $0x20] sm:$0xf]
    %v43 = vld [vmem:[%s0 + $0x24] sm:$0xf]
    %v44 = vld [vmem:[%s0 + $0x28] sm:$0xf]
    %v45 = vld [vmem:[%s0 + $0x2c] sm:$0xf]
    %v46 = vld [vmem:[%s0 + $0x30] sm:$0xf]
    %v47 = vld [vmem:[%s0 + $0x34] sm:$0xf]
    %v48 = vld [vmem:[%s0 + $0x38] sm:$0xf]
    %v49 = vld [vmem:[%s0 + $0x3c] sm:$0xf]
    %v50 = vld [vmem:[%s0 + $0x40] sm:$0xf]
    %v51 = vld [vmem:[%s0 + $0x44] sm:$0xf]
    %v52 = vld [vmem:[%s0 + $0x48] sm:$0xf]
    %v53 = vld [vmem:[%s0 + $0x4c] sm:$0xf]
    %v54 = vld [vmem:[%s0 + $0x50] sm:$0xf]
    %v55 = vld [vmem:[%s0 + $0x54] sm:$0xf]
    %v56 = vld [vmem:[%s0 + $0x58] sm:$0xf]
    %v57 = vld [vmem:[%s0 + $0x5c] sm:$0xf]
    %v58 = vld [vmem:[%s0 + $0x60] sm:$0xf]
    %v59 = vld [vmem:[%s0 + $0x64] sm:$0xf]
    %v60 = vld [vmem:[%s0 + $0x68] sm:$0xf]
    %v61 = vld [vmem:[%s0 + $0x6c] sm:$0xf]
    %v62 = vld [vmem:[%s0 + $0x70] sm:$0xf]
    %v63 = vld [vmem:[%s0 + $0x74] sm:$0xf]
    %v64 = vld [vmem:[%s0 + $0x78] sm:$0xf]
    %v65 = vld [vmem:[%s0 + $0x7c] sm:$0xf]
    %v66 = vld [vmem:[%s1] sm:$0xf]
    %v67 = vld [vmem:[%s2] sm:$0x1]
    %v69 = vlaneseq
    %v70 = vshrl.u32 %v69, 7
    %v71 = vsub.s32 0, %v70
    %v72 = vrot.slane %v67, %v71
    %v106 = vunpack.c.l.b16 %v34
    %v107 = vunpack.c.l.b16 %v35
    %v108 = vunpack.c.l.b16 %v36
    %v109 = vunpack.c.l.b16 %v37
    %v110 = vunpack.c.l.b16 %v38
    %v111 = vunpack.c.l.b16 %v39
    %v112 = vunpack.c.l.b16 %v40
    %v113 = vunpack.c.l.b16 %v41
    %v114 = vunpack.c.l.b16 %v42
    %v115 = vunpack.c.l.b16 %v43
    %v116 = vunpack.c.l.b16 %v44
    %v117 = vunpack.c.l.b16 %v45
    %v118 = vunpack.c.l.b16 %v46
    %v119 = vunpack.c.l.b16 %v47
    %v120 = vunpack.c.l.b16 %v48
    %v121 = vunpack.c.l.b16 %v49
    %v122 = vunpack.c.l.b16 %v50
    %v123 = vunpack.c.l.b16 %v51
    %v124 = vunpack.c.l.b16 %v52
    %v125 = vunpack.c.l.b16 %v53
    %v126 = vunpack.c.l.b16 %v54
    %v127 = vunpack.c.l.b16 %v55
    %v128 = vunpack.c.l.b16 %v56
    %v129 = vunpack.c.l.b16 %v57
    %v130 = vunpack.c.l.b16 %v58
    %v131 = vunpack.c.l.b16 %v59
    %v132 = vunpack.c.l.b16 %v60
    %v133 = vunpack.c.l.b16 %v61
    %v134 = vunpack.c.l.b16 %v62
    %v135 = vunpack.c.l.b16 %v63
    %v136 = vunpack.c.l.b16 %v64
    %v137 = vunpack.c.l.b16 %v65
    %v138 = vpack.c.b16 %v107, %v106
    %v139 = vpack.c.b16 %v109, %v108
    %v140 = vpack.c.b16 %v111, %v110
    %v141 = vpack.c.b16 %v113, %v112
    %v142 = vpack.c.b16 %v115, %v114
    %v143 = vpack.c.b16 %v117, %v116
    %v144 = vpack.c.b16 %v119, %v118
    %v145 = vpack.c.b16 %v121, %v120
    %v146 = vpack.c.b16 %v123, %v122
    %v147 = vpack.c.b16 %v125, %v124
    %v148 = vpack.c.b16 %v127, %v126
    %v149 = vpack.c.b16 %v129, %v128
    %v150 = vpack.c.b16 %v131, %v130
    %v151 = vpack.c.b16 %v133, %v132
    %v152 = vpack.c.b16 %v135, %v134
    %v153 = vpack.c.b16 %v137, %v136
    %vm154 = vcmask 64512
    %v156 = vsel %vm154, %v138, 0
    %v159 = vsel %vm154, %v139, 0
    %v162 = vsel %vm154, %v140, 0
    %v165 = vsel %vm154, %v141, 0
    %v168 = vsel %vm154, %v142, 0
    %v171 = vsel %vm154, %v143, 0
    %v174 = vsel %vm154, %v144, 0
    %v177 = vsel %vm154, %v145, 0
    %v180 = vsel %vm154, %v146, 0
    %v183 = vsel %vm154, %v147, 0
    %v186 = vsel %vm154, %v148, 0
    %v189 = vsel %vm154, %v149, 0
    %v192 = vsel %vm154, %v150, 0
    %v195 = vsel %vm154, %v151, 0
    %v198 = vsel %vm154, %v152, 0
    %v201 = vsel %vm154, %v153, 0
    %vm203 = vcmask 1043456
    %v205 = vsel %vm203, %v66, 0
    %207 = vmatprep.subr.bf16.mxu0 0
    %208 = vmatpush1.bf16.msra.mxu0 %v205
    %209 = vmatprep.subr.bf16.mxu0 0
    %210 = vmatpush1.bf16.msra.mxu0 0
    %211 = vmatprep.subr.bf16.mxu0 0
    %212 = vmatpush1.bf16.msra.mxu0 0
    %213 = vmatprep.subr.bf16.mxu0 0
    %214 = vmatpush1.bf16.msra.mxu0 0
    %215 = vmatprep.subr.bf16.mxu0 0
    %216 = vmatpush1.bf16.msra.mxu0 0
    %217 = vmatprep.subr.bf16.mxu0 0
    %218 = vmatpush1.bf16.msra.mxu0 0
    %219 = vmatprep.subr.bf16.mxu0 0
    %220 = vmatpush1.bf16.msra.mxu0 0
    %221 = vmatprep.subr.bf16.mxu0 0
    %222 = vmatpush1.bf16.msra.mxu0 0
    %223 = vmatprep.subr.bf16.mxu0 0
    %224 = vmatpush1.bf16.msra.mxu0 0
    %225 = vmatprep.subr.bf16.mxu0 0
    %226 = vmatpush1.bf16.msra.mxu0 0
    %227 = vmatprep.subr.bf16.mxu0 0
    %228 = vmatpush1.bf16.msra.mxu0 0
    %229 = vmatprep.subr.bf16.mxu0 0
    %230 = vmatpush1.bf16.msra.mxu0 0
    %231 = vmatprep.subr.bf16.mxu0 0
    %232 = vmatpush1.bf16.msra.mxu0 0
    %233 = vmatprep.subr.bf16.mxu0 0
    %234 = vmatpush1.bf16.msra.mxu0 0
    %235 = vmatprep.subr.bf16.mxu0 0
    %236 = vmatpush1.bf16.msra.mxu0 0
    %237 = vmatprep.subr.bf16.mxu0 0
    %238 = vmatpush1.bf16.msra.mxu0 0
    %239 = vmatprep.mubr.bf16.mxu0 0
    %240 = vmatmul.mubr.bf16.gmra.mrb[0].mxu0 %v156
    %v241 = vpop.f32.mrb[0].mxu0
    %v242 = vadd.f32 %v72, %v241
    %v243 = vpop.f32.mrb[0].mxu0
    %v244 = vpop.f32.mrb[0].mxu0
    %v245 = vadd.f32 %v72, %v244
    %v246 = vpop.f32.mrb[0].mxu0
    %247 = vmatprep.mubr.bf16.mxu0 0
    %248 = vmatmul.mubr.bf16.gmra.mrb[0].mxu0 %v159
    %v249 = vpop.f32.mrb[0].mxu0
    %v250 = vadd.f32 %v72, %v249
    %v251 = vpop.f32.mrb[0].mxu0
    %v252 = vpop.f32.mrb[0].mxu0
    %v253 = vadd.f32 %v72, %v252
    %v254 = vpop.f32.mrb[0].mxu0
    %255 = vmatprep.mubr.bf16.mxu0 0
    %256 = vmatmul.mubr.bf16.gmra.mrb[0].mxu0 %v162
    %v257 = vpop.f32.mrb[0].mxu0
    %v258 = vadd.f32 %v72, %v257
    %v259 = vpop.f32.mrb[0].mxu0
    %v260 = vpop.f32.mrb[0].mxu0
    %v261 = vadd.f32 %v72, %v260
    %v262 = vpop.f32.mrb[0].mxu0
    %263 = vmatprep.mubr.bf16.mxu0 0
    %264 = vmatmul.mubr.bf16.gmra.mrb[0].mxu0 %v165
    %v265 = vpop.f32.mrb[0].mxu0
    %v266 = vadd.f32 %v72, %v265
    %v267 = vpop.f32.mrb[0].mxu0
    %v268 = vpop.f32.mrb[0].mxu0
    %v269 = vadd.f32 %v72, %v268
    %v270 = vpop.f32.mrb[0].mxu0
    %271 = vmatprep.mubr.bf16.mxu0 0
    %272 = vmatmul.mubr.bf16.gmra.mrb[0].mxu0 %v168
    %v273 = vpop.f32.mrb[0].mxu0
    %v274 = vadd.f32 %v72, %v273
    %v275 = vpop.f32.mrb[0].mxu0
    %v276 = vpop.f32.mrb[0].mxu0
    %v277 = vadd.f32 %v72, %v276
    %v278 = vpop.f32.mrb[0].mxu0
    %279 = vmatprep.mubr.bf16.mxu0 0
    %280 = vmatmul.mubr.bf16.gmra.mrb[0].mxu0 %v171
    %v281 = vpop.f32.mrb[0].mxu0
    %v282 = vadd.f32 %v72, %v281
    %v283 = vpop.f32.mrb[0].mxu0
    %v284 = vpop.f32.mrb[0].mxu0
    %v285 = vadd.f32 %v72, %v284
    %v286 = vpop.f32.mrb[0].mxu0
    %287 = vmatprep.mubr.bf16.mxu0 0
    %288 = vmatmul.mubr.bf16.gmra.mrb[0].mxu0 %v174
    %v289 = vpop.f32.mrb[0].mxu0
    %v290 = vadd.f32 %v72, %v289
    %v291 = vpop.f32.mrb[0].mxu0
    %v292 = vpop.f32.mrb[0].mxu0
    %v293 = vadd.f32 %v72, %v292
    %v294 = vpop.f32.mrb[0].mxu0
    %295 = vmatprep.mubr.bf16.mxu0 0
    %296 = vmatmul.mubr.bf16.gmra.mrb[0].mxu0 %v177
    %v297 = vpop.f32.mrb[0].mxu0
    %v298 = vadd.f32 %v72, %v297
    %v299 = vpop.f32.mrb[0].mxu0
    %v300 = vpop.f32.mrb[0].mxu0
    %v301 = vadd.f32 %v72, %v300
    %v302 = vpop.f32.mrb[0].mxu0
    %303 = vmatprep.mubr.bf16.mxu0 0
    %304 = vmatmul.mubr.bf16.gmra.mrb[0].mxu0 %v180
    %v305 = vpop.f32.mrb[0].mxu0
    %v306 = vadd.f32 %v72, %v305
    %v307 = vpop.f32.mrb[0].mxu0
    %v308 = vpop.f32.mrb[0].mxu0
    %v309 = vadd.f32 %v72, %v308
    %v310 = vpop.f32.mrb[0].mxu0
    %311 = vmatprep.mubr.bf16.mxu0 0
    %312 = vmatmul.mubr.bf16.gmra.mrb[0].mxu0 %v183
    %v313 = vpop.f32.mrb[0].mxu0
    %v314 = vadd.f32 %v72, %v313
    %v315 = vpop.f32.mrb[0].mxu0
    %v316 = vpop.f32.mrb[0].mxu0
    %v317 = vadd.f32 %v72, %v316
    %v318 = vpop.f32.mrb[0].mxu0
    %319 = vmatprep.mubr.bf16.mxu0 0
    %320 = vmatmul.mubr.bf16.gmra.mrb[0].mxu0 %v186
    %v321 = vpop.f32.mrb[0].mxu0
    %v322 = vadd.f32 %v72, %v321
    %v323 = vpop.f32.mrb[0].mxu0
    %v324 = vpop.f32.mrb[0].mxu0
    %v325 = vadd.f32 %v72, %v324
    %v326 = vpop.f32.mrb[0].mxu0
    %327 = vmatprep.mubr.bf16.mxu0 0
    %328 = vmatmul.mubr.bf16.gmra.mrb[0].mxu0 %v189
    %v329 = vpop.f32.mrb[0].mxu0
    %v330 = vadd.f32 %v72, %v329
    %v331 = vpop.f32.mrb[0].mxu0
    %v332 = vpop.f32.mrb[0].mxu0
    %v333 = vadd.f32 %v72, %v332
    %v334 = vpop.f32.mrb[0].mxu0
    %335 = vmatprep.mubr.bf16.mxu0 0
    %336 = vmatmul.mubr.bf16.gmra.mrb[0].mxu0 %v192
    %v337 = vpop.f32.mrb[0].mxu0
    %v338 = vadd.f32 %v72, %v337
    %v339 = vpop.f32.mrb[0].mxu0
    %v340 = vpop.f32.mrb[0].mxu0
    %v341 = vadd.f32 %v72, %v340
    %v342 = vpop.f32.mrb[0].mxu0
    %343 = vmatprep.mubr.bf16.mxu0 0
    %344 = vmatmul.mubr.bf16.gmra.mrb[0].mxu0 %v195
    %v345 = vpop.f32.mrb[0].mxu0
    %v346 = vadd.f32 %v72, %v345
    %v347 = vpop.f32.mrb[0].mxu0
    %v348 = vpop.f32.mrb[0].mxu0
    %v349 = vadd.f32 %v72, %v348
    %v350 = vpop.f32.mrb[0].mxu0
    %351 = vmatprep.mubr.bf16.mxu0 0
    %352 = vmatmul.mubr.bf16.gmra.mrb[0].mxu0 %v198
    %v353 = vpop.f32.mrb[0].mxu0
    %v354 = vadd.f32 %v72, %v353
    %v355 = vpop.f32.mrb[0].mxu0
    %v356 = vpop.f32.mrb[0].mxu0
    %v357 = vadd.f32 %v72, %v356
    %v358 = vpop.f32.mrb[0].mxu0
    %359 = vmatprep.mubr.bf16.mxu0 0
    %360 = vmatmul.mubr.bf16.gmra.mrb[0].mxu0 %v201
    %v361 = vpop.f32.mrb[0].mxu0
    %v362 = vadd.f32 %v72, %v361
    %v363 = vpop.f32.mrb[0].mxu0
    %v364 = vpop.f32.mrb[0].mxu0
    %v365 = vadd.f32 %v72, %v364
    %v366 = vpop.f32.mrb[0].mxu0
    %367 = vdwg.mxu0
    %v368 = vtanh.pop %v242
    %v369 = vtanh.pop %v245
    %v370 = vtanh.pop %v250
    %v371 = vtanh.pop %v253
    %v372 = vtanh.pop %v258
    %v373 = vtanh.pop %v261
    %v374 = vtanh.pop %v266
    %v375 = vtanh.pop %v269
    %v376 = vtanh.pop %v274
    %v377 = vtanh.pop %v277
    %v378 = vtanh.pop %v282
    %v379 = vtanh.pop %v285
    %v380 = vtanh.pop %v290
    %v381 = vtanh.pop %v293
    %v382 = vtanh.pop %v298
    %v383 = vtanh.pop %v301
    %v384 = vtanh.pop %v306
    %v385 = vtanh.pop %v309
    %v386 = vtanh.pop %v314
    %v387 = vtanh.pop %v317
    %v388 = vtanh.pop %v322
    %v389 = vtanh.pop %v325
    %v390 = vtanh.pop %v330
    %v391 = vtanh.pop %v333
    %v392 = vtanh.pop %v338
    %v393 = vtanh.pop %v341
    %v394 = vtanh.pop %v346
    %v395 = vtanh.pop %v349
    %v396 = vtanh.pop %v354
    %v397 = vtanh.pop %v357
    %v398 = vtanh.pop %v362
    %v399 = vtanh.pop %v365
    %v400 = vpack.c.bf16 %v369, %v368
    %v401 = vpack.c.bf16 %v371, %v370
    %v402 = vpack.c.bf16 %v373, %v372
    %v403 = vpack.c.bf16 %v375, %v374
    %v404 = vpack.c.bf16 %v377, %v376
    %v405 = vpack.c.bf16 %v379, %v378
    %v406 = vpack.c.bf16 %v381, %v380
    %v407 = vpack.c.bf16 %v383, %v382
    %v408 = vpack.c.bf16 %v385, %v384
    %v409 = vpack.c.bf16 %v387, %v386
    %v410 = vpack.c.bf16 %v389, %v388
    %v411 = vpack.c.bf16 %v391, %v390
    %v412 = vpack.c.bf16 %v393, %v392
    %v413 = vpack.c.bf16 %v395, %v394
    %v414 = vpack.c.bf16 %v397, %v396
    %v415 = vpack.c.bf16 %v399, %v398
    %v416 = vld [vmem:[%s3] sm:$0xf]
    %v417 = vld [vmem:[%s3 + $0x4] sm:$0xf]
    %v418 = vld [vmem:[%s3 + $0x8] sm:$0xf]
    %v419 = vld [vmem:[%s3 + $0xc] sm:$0xf]
    %v420 = vld [vmem:[%s3 + $0x10] sm:$0xf]
    %v421 = vld [vmem:[%s3 + $0x14] sm:$0xf]
    %v422 = vld [vmem:[%s3 + $0x18] sm:$0xf]
    %v423 = vld [vmem:[%s3 + $0x1c] sm:$0xf]
    %v424 = vld [vmem:[%s4] sm:$0x1]
    %v426 = vlaneseq
    %v427 = vshrl.u32 %v426, 7
    %v428 = vsub.s32 0, %v427
    %v429 = vrot.slane %v424, %v428
    %v439 = vunpack.c.l.b16 %v416
    %v440 = vunpack.c.l.b16 %v417
    %v441 = vunpack.c.l.b16 %v418
    %v442 = vunpack.c.l.b16 %v419
    %v443 = vunpack.c.l.b16 %v420
    %v444 = vunpack.c.l.b16 %v421
    %v445 = vunpack.c.l.b16 %v422
    %v446 = vunpack.c.l.b16 %v423
    %v447 = vpack.c.b16 %v440, %v439
    %v448 = vpack.c.b16 %v442, %v441
    %v449 = vpack.c.b16 %v444, %v443
    %v450 = vpack.c.b16 %v446, %v445
    %vm455 = vcmask 523264
    %v457 = vsel %vm455, %v400, 0
    %v460 = vsel %vm455, %v401, 0
    %v463 = vsel %vm455, %v402, 0
    %v466 = vsel %vm455, %v403, 0
    %v469 = vsel %vm455, %v404, 0
    %v472 = vsel %vm455, %v405, 0
    %v475 = vsel %vm455, %v406, 0
    %v478 = vsel %vm455, %v407, 0
    %v481 = vsel %vm455, %v408, 0
    %v484 = vsel %vm455, %v409, 0
    %v487 = vsel %vm455, %v410, 0
    %v490 = vsel %vm455, %v411, 0
    %v493 = vsel %vm455, %v412, 0
    %v496 = vsel %vm455, %v413, 0
    %v499 = vsel %vm455, %v414, 0
    %v502 = vsel %vm455, %v415, 0
    %504 = vmatprep.subr.bf16.mxu0 0
    %505 = vmatpush1.bf16.msra.mxu0 %v447
    %506 = vmatprep.subr.bf16.mxu0 0
    %507 = vmatpush1.bf16.msra.mxu0 %v448
    %508 = vmatprep.subr.bf16.mxu0 0
    %509 = vmatpush1.bf16.msra.mxu0 %v449
    %510 = vmatprep.subr.bf16.mxu0 0
    %511 = vmatpush1.bf16.msra.mxu0 %v450
    %512 = vmatprep.subr.bf16.mxu0 0
    %513 = vmatpush1.bf16.msra.mxu0 0
    %514 = vmatprep.subr.bf16.mxu0 0
    %515 = vmatpush1.bf16.msra.mxu0 0
    %516 = vmatprep.subr.bf16.mxu0 0
    %517 = vmatpush1.bf16.msra.mxu0 0
    %518 = vmatprep.subr.bf16.mxu0 0
    %519 = vmatpush1.bf16.msra.mxu0 0
    %520 = vmatprep.subr.bf16.mxu0 0
    %521 = vmatpush1.bf16.msra.mxu0 0
    %522 = vmatprep.subr.bf16.mxu0 0
    %523 = vmatpush1.bf16.msra.mxu0 0
    %524 = vmatprep.subr.bf16.mxu0 0
    %525 = vmatpush1.bf16.msra.mxu0 0
    %526 = vmatprep.subr.bf16.mxu0 0
    %527 = vmatpush1.bf16.msra.mxu0 0
    %528 = vmatprep.subr.bf16.mxu0 0
    %529 = vmatpush1.bf16.msra.mxu0 0
    %530 = vmatprep.subr.bf16.mxu0 0
    %531 = vmatpush1.bf16.msra.mxu0 0
    %532 = vmatprep.subr.bf16.mxu0 0
    %533 = vmatpush1.bf16.msra.mxu0 0
    %534 = vmatprep.subr.bf16.mxu0 0
    %535 = vmatpush1.bf16.msra.mxu0 0
    %536 = vmatprep.mubr.bf16.mxu0 0
    %537 = vmatmul.mubr.bf16.gmra.mrb[0].mxu0 %v457
    %v538 = vpop.f32.mrb[0].mxu0
    %v539 = vadd.f32 %v429, %v538
    %v540 = vpop.f32.mrb[0].mxu0
    %v541 = vpop.f32.mrb[0].mxu0
    %v542 = vadd.f32 %v429, %v541
    %v543 = vpop.f32.mrb[0].mxu0
    %544 = vmatprep.mubr.bf16.mxu0 0
    %545 = vmatmul.mubr.bf16.gmra.mrb[0].mxu0 %v460
    %v546 = vpop.f32.mrb[0].mxu0
    %v547 = vadd.f32 %v429, %v546
    %v548 = vpop.f32.mrb[0].mxu0
    %v549 = vpop.f32.mrb[0].mxu0
    %v550 = vadd.f32 %v429, %v549
    %v551 = vpop.f32.mrb[0].mxu0
    %552 = vmatprep.mubr.bf16.mxu0 0
    %553 = vmatmul.mubr.bf16.gmra.mrb[0].mxu0 %v463
    %v554 = vpop.f32.mrb[0].mxu0
    %v555 = vadd.f32 %v429, %v554
    %v556 = vpop.f32.mrb[0].mxu0
    %v557 = vpop.f32.mrb[0].mxu0
    %v558 = vadd.f32 %v429, %v557
    %v559 = vpop.f32.mrb[0].mxu0
    %560 = vmatprep.mubr.bf16.mxu0 0
    %561 = vmatmul.mubr.bf16.gmra.mrb[0].mxu0 %v466
    %v562 = vpop.f32.mrb[0].mxu0
    %v563 = vadd.f32 %v429, %v562
    %v564 = vpop.f32.mrb[0].mxu0
    %v565 = vpop.f32.mrb[0].mxu0
    %v566 = vadd.f32 %v429, %v565
    %v567 = vpop.f32.mrb[0].mxu0
    %568 = vmatprep.mubr.bf16.mxu0 0
    %569 = vmatmul.mubr.bf16.gmra.mrb[0].mxu0 %v469
    %v570 = vpop.f32.mrb[0].mxu0
    %v571 = vadd.f32 %v429, %v570
    %v572 = vpop.f32.mrb[0].mxu0
    %v573 = vpop.f32.mrb[0].mxu0
    %v574 = vadd.f32 %v429, %v573
    %v575 = vpop.f32.mrb[0].mxu0
    %576 = vmatprep.mubr.bf16.mxu0 0
    %577 = vmatmul.mubr.bf16.gmra.mrb[0].mxu0 %v472
    %v578 = vpop.f32.mrb[0].mxu0
    %v579 = vadd.f32 %v429, %v578
    %v580 = vpop.f32.mrb[0].mxu0
    %v581 = vpop.f32.mrb[0].mxu0
    %v582 = vadd.f32 %v429, %v581
    %v583 = vpop.f32.mrb[0].mxu0
    %584 = vmatprep.mubr.bf16.mxu0 0
    %585 = vmatmul.mubr.bf16.gmra.mrb[0].mxu0 %v475
    %v586 = vpop.f32.mrb[0].mxu0
    %v587 = vadd.f32 %v429, %v586
    %v588 = vpop.f32.mrb[0].mxu0
    %v589 = vpop.f32.mrb[0].mxu0
    %v590 = vadd.f32 %v429, %v589
    %v591 = vpop.f32.mrb[0].mxu0
    %592 = vmatprep.mubr.bf16.mxu0 0
    %593 = vmatmul.mubr.bf16.gmra.mrb[0].mxu0 %v478
    %v594 = vpop.f32.mrb[0].mxu0
    %v595 = vadd.f32 %v429, %v594
    %v596 = vpop.f32.mrb[0].mxu0
    %v597 = vpop.f32.mrb[0].mxu0
    %v598 = vadd.f32 %v429, %v597
    %v599 = vpop.f32.mrb[0].mxu0
    %600 = vmatprep.mubr.bf16.mxu0 0
    %601 = vmatmul.mubr.bf16.gmra.mrb[0].mxu0 %v481
    %v602 = vpop.f32.mrb[0].mxu0
    %v603 = vadd.f32 %v429, %v602
    %v604 = vpop.f32.mrb[0].mxu0
    %v605 = vpop.f32.mrb[0].mxu0
    %v606 = vadd.f32 %v429, %v605
    %v607 = vpop.f32.mrb[0].mxu0
    %608 = vmatprep.mubr.bf16.mxu0 0
    %609 = vmatmul.mubr.bf16.gmra.mrb[0].mxu0 %v484
    %v610 = vpop.f32.mrb[0].mxu0
    %v611 = vadd.f32 %v429, %v610
    %v612 = vpop.f32.mrb[0].mxu0
    %v613 = vpop.f32.mrb[0].mxu0
    %v614 = vadd.f32 %v429, %v613
    %v615 = vpop.f32.mrb[0].mxu0
    %616 = vmatprep.mubr.bf16.mxu0 0
    %617 = vmatmul.mubr.bf16.gmra.mrb[0].mxu0 %v487
    %v618 = vpop.f32.mrb[0].mxu0
    %v619 = vadd.f32 %v429, %v618
    %v620 = vpop.f32.mrb[0].mxu0
    %v621 = vpop.f32.mrb[0].mxu0
    %v622 = vadd.f32 %v429, %v621
    %v623 = vpop.f32.mrb[0].mxu0
    %624 = vmatprep.mubr.bf16.mxu0 0
    %625 = vmatmul.mubr.bf16.gmra.mrb[0].mxu0 %v490
    %v626 = vpop.f32.mrb[0].mxu0
    %v627 = vadd.f32 %v429, %v626
    %v628 = vpop.f32.mrb[0].mxu0
    %v629 = vpop.f32.mrb[0].mxu0
    %v630 = vadd.f32 %v429, %v629
    %v631 = vpop.f32.mrb[0].mxu0
    %632 = vmatprep.mubr.bf16.mxu0 0
    %633 = vmatmul.mubr.bf16.gmra.mrb[0].mxu0 %v493
    %v634 = vpop.f32.mrb[0].mxu0
    %v635 = vadd.f32 %v429, %v634
    %v636 = vpop.f32.mrb[0].mxu0
    %v637 = vpop.f32.mrb[0].mxu0
    %v638 = vadd.f32 %v429, %v637
    %v639 = vpop.f32.mrb[0].mxu0
    %640 = vmatprep.mubr.bf16.mxu0 0
    %641 = vmatmul.mubr.bf16.gmra.mrb[0].mxu0 %v496
    %v642 = vpop.f32.mrb[0].mxu0
    %v643 = vadd.f32 %v429, %v642
    %v644 = vpop.f32.mrb[0].mxu0
    %v645 = vpop.f32.mrb[0].mxu0
    %v646 = vadd.f32 %v429, %v645
    %v647 = vpop.f32.mrb[0].mxu0
    %648 = vmatprep.mubr.bf16.mxu0 0
    %649 = vmatmul.mubr.bf16.gmra.mrb[0].mxu0 %v499
    %v650 = vpop.f32.mrb[0].mxu0
    %v651 = vadd.f32 %v429, %v650
    %v652 = vpop.f32.mrb[0].mxu0
    %v653 = vpop.f32.mrb[0].mxu0
    %v654 = vadd.f32 %v429, %v653
    %v655 = vpop.f32.mrb[0].mxu0
    %656 = vmatprep.mubr.bf16.mxu0 0
    %657 = vmatmul.mubr.bf16.gmra.mrb[0].mxu0 %v502
    %v658 = vpop.f32.mrb[0].mxu0
    %v659 = vadd.f32 %v429, %v658
    %v660 = vpop.f32.mrb[0].mxu0
    %v661 = vpop.f32.mrb[0].mxu0
    %v662 = vadd.f32 %v429, %v661
    %v663 = vpop.f32.mrb[0].mxu0
    %664 = vdwg.mxu0
    %v665 = vtanh.pop %v539
    %v666 = vtanh.pop %v542
    %v667 = vtanh.pop %v547
    %v668 = vtanh.pop %v550
    %v669 = vtanh.pop %v555
    %v670 = vtanh.pop %v558
    %v671 = vtanh.pop %v563
    %v672 = vtanh.pop %v566
    %v673 = vtanh.pop %v571
    %v674 = vtanh.pop %v574
    %v675 = vtanh.pop %v579
    %v676 = vtanh.pop %v582
    %v677 = vtanh.pop %v587
    %v678 = vtanh.pop %v590
    %v679 = vtanh.pop %v595
    %v680 = vtanh.pop %v598
    %v681 = vtanh.pop %v603
    %v682 = vtanh.pop %v606
    %v683 = vtanh.pop %v611
    %v684 = vtanh.pop %v614
    %v685 = vtanh.pop %v619
    %v686 = vtanh.pop %v622
    %v687 = vtanh.pop %v627
    %v688 = vtanh.pop %v630
    %v689 = vtanh.pop %v635
    %v690 = vtanh.pop %v638
    %v691 = vtanh.pop %v643
    %v692 = vtanh.pop %v646
    %v693 = vtanh.pop %v651
    %v694 = vtanh.pop %v654
    %v695 = vtanh.pop %v659
    %v696 = vtanh.pop %v662
    %v697 = vpack.c.bf16 %v666, %v665
    %v698 = vpack.c.bf16 %v668, %v667
    %v699 = vpack.c.bf16 %v670, %v669
    %v700 = vpack.c.bf16 %v672, %v671
    %v701 = vpack.c.bf16 %v674, %v673
    %v702 = vpack.c.bf16 %v676, %v675
    %v703 = vpack.c.bf16 %v678, %v677
    %v704 = vpack.c.bf16 %v680, %v679
    %v705 = vpack.c.bf16 %v682, %v681
    %v706 = vpack.c.bf16 %v684, %v683
    %v707 = vpack.c.bf16 %v686, %v685
    %v708 = vpack.c.bf16 %v688, %v687
    %v709 = vpack.c.bf16 %v690, %v689
    %v710 = vpack.c.bf16 %v692, %v691
    %v711 = vpack.c.bf16 %v694, %v693
    %v712 = vpack.c.bf16 %v696, %v695
    %v713 = vld [vmem:[%s5] sm:$0xf]
    %v714 = vld [vmem:[%s5 + $0x4] sm:$0xf]
    %v715 = vld [vmem:[%s5 + $0x8] sm:$0xf]
    %v716 = vld [vmem:[%s5 + $0xc] sm:$0xf]
    %v717 = vld [vmem:[%s5 + $0x10] sm:$0xf]
    %v718 = vld [vmem:[%s5 + $0x14] sm:$0xf]
    %v719 = vld [vmem:[%s5 + $0x18] sm:$0xf]
    %v720 = vld [vmem:[%s5 + $0x1c] sm:$0xf]
    %v721 = vld [vmem:[%s6] sm:$0x1]
    %v723 = vlaneseq
    %v724 = vshrl.u32 %v723, 7
    %v725 = vsub.s32 0, %v724
    %v726 = vrot.slane %v721, %v725
    %v736 = vunpack.c.l.b16 %v713
    %v737 = vunpack.c.l.b16 %v714
    %v738 = vunpack.c.l.b16 %v715
    %v739 = vunpack.c.l.b16 %v716
    %v740 = vunpack.c.l.b16 %v717
    %v741 = vunpack.c.l.b16 %v718
    %v742 = vunpack.c.l.b16 %v719
    %v743 = vunpack.c.l.b16 %v720
    %v744 = vpack.c.b16 %v737, %v736
    %v745 = vpack.c.b16 %v739, %v738
    %v746 = vpack.c.b16 %v741, %v740
    %v747 = vpack.c.b16 %v743, %v742
    %v753 = vsel %vm455, %v697, 0
    %v756 = vsel %vm455, %v698, 0
    %v759 = vsel %vm455, %v699, 0
    %v762 = vsel %vm455, %v700, 0
    %v765 = vsel %vm455, %v701, 0
    %v768 = vsel %vm455, %v702, 0
    %v771 = vsel %vm455, %v703, 0
    %v774 = vsel %vm455, %v704, 0
    %v777 = vsel %vm455, %v705, 0
    %v780 = vsel %vm455, %v706, 0
    %v783 = vsel %vm455, %v707, 0
    %v786 = vsel %vm455, %v708, 0
    %v789 = vsel %vm455, %v709, 0
    %v792 = vsel %vm455, %v710, 0
    %v795 = vsel %vm455, %v711, 0
    %v798 = vsel %vm455, %v712, 0
    %800 = vmatprep.subr.bf16.mxu0 0
    %801 = vmatpush1.bf16.msra.mxu0 %v744
    %802 = vmatprep.subr.bf16.mxu0 0
    %803 = vmatpush1.bf16.msra.mxu0 %v745
    %804 = vmatprep.subr.bf16.mxu0 0
    %805 = vmatpush1.bf16.msra.mxu0 %v746
    %806 = vmatprep.subr.bf16.mxu0 0
    %807 = vmatpush1.bf16.msra.mxu0 %v747
    %808 = vmatprep.subr.bf16.mxu0 0
    %809 = vmatpush1.bf16.msra.mxu0 0
    %810 = vmatprep.subr.bf16.mxu0 0
    %811 = vmatpush1.bf16.msra.mxu0 0
    %812 = vmatprep.subr.bf16.mxu0 0
    %813 = vmatpush1.bf16.msra.mxu0 0
    %814 = vmatprep.subr.bf16.mxu0 0
    %815 = vmatpush1.bf16.msra.mxu0 0
    %816 = vmatprep.subr.bf16.mxu0 0
    %817 = vmatpush1.bf16.msra.mxu0 0
    %818 = vmatprep.subr.bf16.mxu0 0
    %819 = vmatpush1.bf16.msra.mxu0 0
    %820 = vmatprep.subr.bf16.mxu0 0
    %821 = vmatpush1.bf16.msra.mxu0 0
    %822 = vmatprep.subr.bf16.mxu0 0
    %823 = vmatpush1.bf16.msra.mxu0 0
    %824 = vmatprep.subr.bf16.mxu0 0
    %825 = vmatpush1.bf16.msra.mxu0 0
    %826 = vmatprep.subr.bf16.mxu0 0
    %827 = vmatpush1.bf16.msra.mxu0 0
    %828 = vmatprep.subr.bf16.mxu0 0
    %829 = vmatpush1.bf16.msra.mxu0 0
    %830 = vmatprep.subr.bf16.mxu0 0
    %831 = vmatpush1.bf16.msra.mxu0 0
    %832 = vmatprep.mubr.bf16.mxu0 0
    %833 = vmatmul.mubr.bf16.gmra.mrb[0].mxu0 %v753
    %v834 = vpop.f32.mrb[0].mxu0
    %v835 = vadd.f32 %v726, %v834
    %v836 = vpop.f32.mrb[0].mxu0
    %v837 = vpop.f32.mrb[0].mxu0
    %v838 = vadd.f32 %v726, %v837
    %v839 = vpop.f32.mrb[0].mxu0
    %840 = vmatprep.mubr.bf16.mxu0 0
    %841 = vmatmul.mubr.bf16.gmra.mrb[0].mxu0 %v756
    %v842 = vpop.f32.mrb[0].mxu0
    %v843 = vadd.f32 %v726, %v842
    %v844 = vpop.f32.mrb[0].mxu0
    %v845 = vpop.f32.mrb[0].mxu0
    %v846 = vadd.f32 %v726, %v845
    %v847 = vpop.f32.mrb[0].mxu0
    %848 = vmatprep.mubr.bf16.mxu0 0
    %849 = vmatmul.mubr.bf16.gmra.mrb[0].mxu0 %v759
    %v850 = vpop.f32.mrb[0].mxu0
    %v851 = vadd.f32 %v726, %v850
    %v852 = vpop.f32.mrb[0].mxu0
    %v853 = vpop.f32.mrb[0].mxu0
    %v854 = vadd.f32 %v726, %v853
    %v855 = vpop.f32.mrb[0].mxu0
    %856 = vmatprep.mubr.bf16.mxu0 0
    %857 = vmatmul.mubr.bf16.gmra.mrb[0].mxu0 %v762
    %v858 = vpop.f32.mrb[0].mxu0
    %v859 = vadd.f32 %v726, %v858
    %v860 = vpop.f32.mrb[0].mxu0
    %v861 = vpop.f32.mrb[0].mxu0
    %v862 = vadd.f32 %v726, %v861
    %v863 = vpop.f32.mrb[0].mxu0
    %864 = vmatprep.mubr.bf16.mxu0 0
    %865 = vmatmul.mubr.bf16.gmra.mrb[0].mxu0 %v765
    %v866 = vpop.f32.mrb[0].mxu0
    %v867 = vadd.f32 %v726, %v866
    %v868 = vpop.f32.mrb[0].mxu0
    %v869 = vpop.f32.mrb[0].mxu0
    %v870 = vadd.f32 %v726, %v869
    %v871 = vpop.f32.mrb[0].mxu0
    %872 = vmatprep.mubr.bf16.mxu0 0
    %873 = vmatmul.mubr.bf16.gmra.mrb[0].mxu0 %v768
    %v874 = vpop.f32.mrb[0].mxu0
    %v875 = vadd.f32 %v726, %v874
    %v876 = vpop.f32.mrb[0].mxu0
    %v877 = vpop.f32.mrb[0].mxu0
    %v878 = vadd.f32 %v726, %v877
    %v879 = vpop.f32.mrb[0].mxu0
    %880 = vmatprep.mubr.bf16.mxu0 0
    %881 = vmatmul.mubr.bf16.gmra.mrb[0].mxu0 %v771
    %v882 = vpop.f32.mrb[0].mxu0
    %v883 = vadd.f32 %v726, %v882
    %v884 = vpop.f32.mrb[0].mxu0
    %v885 = vpop.f32.mrb[0].mxu0
    %v886 = vadd.f32 %v726, %v885
    %v887 = vpop.f32.mrb[0].mxu0
    %888 = vmatprep.mubr.bf16.mxu0 0
    %889 = vmatmul.mubr.bf16.gmra.mrb[0].mxu0 %v774
    %v890 = vpop.f32.mrb[0].mxu0
    %v891 = vadd.f32 %v726, %v890
    %v892 = vpop.f32.mrb[0].mxu0
    %v893 = vpop.f32.mrb[0].mxu0
    %v894 = vadd.f32 %v726, %v893
    %v895 = vpop.f32.mrb[0].mxu0
    %896 = vmatprep.mubr.bf16.mxu0 0
    %897 = vmatmul.mubr.bf16.gmra.mrb[0].mxu0 %v777
    %v898 = vpop.f32.mrb[0].mxu0
    %v899 = vadd.f32 %v726, %v898
    %v900 = vpop.f32.mrb[0].mxu0
    %v901 = vpop.f32.mrb[0].mxu0
    %v902 = vadd.f32 %v726, %v901
    %v903 = vpop.f32.mrb[0].mxu0
    %904 = vmatprep.mubr.bf16.mxu0 0
    %905 = vmatmul.mubr.bf16.gmra.mrb[0].mxu0 %v780
    %v906 = vpop.f32.mrb[0].mxu0
    %v907 = vadd.f32 %v726, %v906
    %v908 = vpop.f32.mrb[0].mxu0
    %v909 = vpop.f32.mrb[0].mxu0
    %v910 = vadd.f32 %v726, %v909
    %v911 = vpop.f32.mrb[0].mxu0
    %912 = vmatprep.mubr.bf16.mxu0 0
    %913 = vmatmul.mubr.bf16.gmra.mrb[0].mxu0 %v783
    %v914 = vpop.f32.mrb[0].mxu0
    %v915 = vadd.f32 %v726, %v914
    %v916 = vpop.f32.mrb[0].mxu0
    %v917 = vpop.f32.mrb[0].mxu0
    %v918 = vadd.f32 %v726, %v917
    %v919 = vpop.f32.mrb[0].mxu0
    %920 = vmatprep.mubr.bf16.mxu0 0
    %921 = vmatmul.mubr.bf16.gmra.mrb[0].mxu0 %v786
    %v922 = vpop.f32.mrb[0].mxu0
    %v923 = vadd.f32 %v726, %v922
    %v924 = vpop.f32.mrb[0].mxu0
    %v925 = vpop.f32.mrb[0].mxu0
    %v926 = vadd.f32 %v726, %v925
    %v927 = vpop.f32.mrb[0].mxu0
    %928 = vmatprep.mubr.bf16.mxu0 0
    %929 = vmatmul.mubr.bf16.gmra.mrb[0].mxu0 %v789
    %v930 = vpop.f32.mrb[0].mxu0
    %v931 = vadd.f32 %v726, %v930
    %v932 = vpop.f32.mrb[0].mxu0
    %v933 = vpop.f32.mrb[0].mxu0
    %v934 = vadd.f32 %v726, %v933
    %v935 = vpop.f32.mrb[0].mxu0
    %936 = vmatprep.mubr.bf16.mxu0 0
    %937 = vmatmul.mubr.bf16.gmra.mrb[0].mxu0 %v792
    %v938 = vpop.f32.mrb[0].mxu0
    %v939 = vadd.f32 %v726, %v938
    %v940 = vpop.f32.mrb[0].mxu0
    %v941 = vpop.f32.mrb[0].mxu0
    %v942 = vadd.f32 %v726, %v941
    %v943 = vpop.f32.mrb[0].mxu0
    %944 = vmatprep.mubr.bf16.mxu0 0
    %945 = vmatmul.mubr.bf16.gmra.mrb[0].mxu0 %v795
    %v946 = vpop.f32.mrb[0].mxu0
    %v947 = vadd.f32 %v726, %v946
    %v948 = vpop.f32.mrb[0].mxu0
    %v949 = vpop.f32.mrb[0].mxu0
    %v950 = vadd.f32 %v726, %v949
    %v951 = vpop.f32.mrb[0].mxu0
    %952 = vmatprep.mubr.bf16.mxu0 0
    %953 = vmatmul.mubr.bf16.gmra.mrb[0].mxu0 %v798
    %v954 = vpop.f32.mrb[0].mxu0
    %v955 = vadd.f32 %v726, %v954
    %v956 = vpop.f32.mrb[0].mxu0
    %v957 = vpop.f32.mrb[0].mxu0
    %v958 = vadd.f32 %v726, %v957
    %v959 = vpop.f32.mrb[0].mxu0
    %960 = vdwg.mxu0
    %v961 = vtanh.pop %v835
    %v962 = vtanh.pop %v838
    %v963 = vtanh.pop %v843
    %v964 = vtanh.pop %v846
    %v965 = vtanh.pop %v851
    %v966 = vtanh.pop %v854
    %v967 = vtanh.pop %v859
    %v968 = vtanh.pop %v862
    %v969 = vtanh.pop %v867
    %v970 = vtanh.pop %v870
    %v971 = vtanh.pop %v875
    %v972 = vtanh.pop %v878
    %v973 = vtanh.pop %v883
    %v974 = vtanh.pop %v886
    %v975 = vtanh.pop %v891
    %v976 = vtanh.pop %v894
    %v977 = vtanh.pop %v899
    %v978 = vtanh.pop %v902
    %v979 = vtanh.pop %v907
    %v980 = vtanh.pop %v910
    %v981 = vtanh.pop %v915
    %v982 = vtanh.pop %v918
    %v983 = vtanh.pop %v923
    %v984 = vtanh.pop %v926
    %v985 = vtanh.pop %v931
    %v986 = vtanh.pop %v934
    %v987 = vtanh.pop %v939
    %v988 = vtanh.pop %v942
    %v989 = vtanh.pop %v947
    %v990 = vtanh.pop %v950
    %v991 = vtanh.pop %v955
    %v992 = vtanh.pop %v958
    %v993 = vpack.c.bf16 %v962, %v961
    %v994 = vpack.c.bf16 %v964, %v963
    %v995 = vpack.c.bf16 %v966, %v965
    %v996 = vpack.c.bf16 %v968, %v967
    %v997 = vpack.c.bf16 %v970, %v969
    %v998 = vpack.c.bf16 %v972, %v971
    %v999 = vpack.c.bf16 %v974, %v973
    %v1000 = vpack.c.bf16 %v976, %v975
    %v1001 = vpack.c.bf16 %v978, %v977
    %v1002 = vpack.c.bf16 %v980, %v979
    %v1003 = vpack.c.bf16 %v982, %v981
    %v1004 = vpack.c.bf16 %v984, %v983
    %v1005 = vpack.c.bf16 %v986, %v985
    %v1006 = vpack.c.bf16 %v988, %v987
    %v1007 = vpack.c.bf16 %v990, %v989
    %v1008 = vpack.c.bf16 %v992, %v991
    %v1009 = vld [vmem:[%s7] sm:$0xf]
    %v1010 = vld [vmem:[%s7 + $0x4] sm:$0xf]
    %v1011 = vld [vmem:[%s7 + $0x8] sm:$0xf]
    %v1012 = vld [vmem:[%s7 + $0xc] sm:$0xf]
    %v1013 = vld [vmem:[%s7 + $0x10] sm:$0xf]
    %v1014 = vld [vmem:[%s7 + $0x14] sm:$0xf]
    %v1015 = vld [vmem:[%s7 + $0x18] sm:$0xf]
    %v1016 = vld [vmem:[%s7 + $0x1c] sm:$0xf]
    %v1017 = vld [vmem:[%s8] sm:$0x1]
    %v1019 = vlaneseq
    %v1020 = vshrl.u32 %v1019, 7
    %v1021 = vsub.s32 0, %v1020
    %v1022 = vrot.slane %v1017, %v1021
    %v1032 = vunpack.c.l.b16 %v1009
    %v1033 = vunpack.c.l.b16 %v1010
    %v1034 = vunpack.c.l.b16 %v1011
    %v1035 = vunpack.c.l.b16 %v1012
    %v1036 = vunpack.c.l.b16 %v1013
    %v1037 = vunpack.c.l.b16 %v1014
    %v1038 = vunpack.c.l.b16 %v1015
    %v1039 = vunpack.c.l.b16 %v1016
    %v1040 = vpack.c.b16 %v1033, %v1032
    %v1041 = vpack.c.b16 %v1035, %v1034
    %v1042 = vpack.c.b16 %v1037, %v1036
    %v1043 = vpack.c.b16 %v1039, %v1038
    %v1049 = vsel %vm455, %v993, 0
    %v1052 = vsel %vm455, %v994, 0
    %v1055 = vsel %vm455, %v995, 0
    %v1058 = vsel %vm455, %v996, 0
    %v1061 = vsel %vm455, %v997, 0
    %v1064 = vsel %vm455, %v998, 0
    %v1067 = vsel %vm455, %v999, 0
    %v1070 = vsel %vm455, %v1000, 0
    %v1073 = vsel %vm455, %v1001, 0
    %v1076 = vsel %vm455, %v1002, 0
    %v1079 = vsel %vm455, %v1003, 0
    %v1082 = vsel %vm455, %v1004, 0
    %v1085 = vsel %vm455, %v1005, 0
    %v1088 = vsel %vm455, %v1006, 0
    %v1091 = vsel %vm455, %v1007, 0
    %v1094 = vsel %vm455, %v1008, 0
    %1096 = vmatprep.subr.bf16.mxu0 0
    %1097 = vmatpush1.bf16.msra.mxu0 %v1040
    %1098 = vmatprep.subr.bf16.mxu0 0
    %1099 = vmatpush1.bf16.msra.mxu0 %v1041
    %1100 = vmatprep.subr.bf16.mxu0 0
    %1101 = vmatpush1.bf16.msra.mxu0 %v1042
    %1102 = vmatprep.subr.bf16.mxu0 0
    %1103 = vmatpush1.bf16.msra.mxu0 %v1043
    %1104 = vmatprep.subr.bf16.mxu0 0
    %1105 = vmatpush1.bf16.msra.mxu0 0
    %1106 = vmatprep.subr.bf16.mxu0 0
    %1107 = vmatpush1.bf16.msra.mxu0 0
    %1108 = vmatprep.subr.bf16.mxu0 0
    %1109 = vmatpush1.bf16.msra.mxu0 0
    %1110 = vmatprep.subr.bf16.mxu0 0
    %1111 = vmatpush1.bf16.msra.mxu0 0
    %1112 = vmatprep.subr.bf16.mxu0 0
    %1113 = vmatpush1.bf16.msra.mxu0 0
    %1114 = vmatprep.subr.bf16.mxu0 0
    %1115 = vmatpush1.bf16.msra.mxu0 0
    %1116 = vmatprep.subr.bf16.mxu0 0
    %1117 = vmatpush1.bf16.msra.mxu0 0
    %1118 = vmatprep.subr.bf16.mxu0 0
    %1119 = vmatpush1.bf16.msra.mxu0 0
    %1120 = vmatprep.subr.bf16.mxu0 0
    %1121 = vmatpush1.bf16.msra.mxu0 0
    %1122 = vmatprep.subr.bf16.mxu0 0
    %1123 = vmatpush1.bf16.msra.mxu0 0
    %1124 = vmatprep.subr.bf16.mxu0 0
    %1125 = vmatpush1.bf16.msra.mxu0 0
    %1126 = vmatprep.subr.bf16.mxu0 0
    %1127 = vmatpush1.bf16.msra.mxu0 0
    %1128 = vmatprep.mubr.bf16.mxu0 0
    %1129 = vmatmul.mubr.bf16.gmra.mrb[0].mxu0 %v1049
    %v1130 = vpop.f32.mrb[0].mxu0
    %v1131 = vadd.f32 %v1022, %v1130
    %v1132 = vpop.f32.mrb[0].mxu0
    %v1133 = vpop.f32.mrb[0].mxu0
    %v1134 = vadd.f32 %v1022, %v1133
    %v1135 = vpop.f32.mrb[0].mxu0
    %1136 = vmatprep.mubr.bf16.mxu0 0
    %1137 = vmatmul.mubr.bf16.gmra.mrb[0].mxu0 %v1052
    %v1138 = vpop.f32.mrb[0].mxu0
    %v1139 = vadd.f32 %v1022, %v1138
    %v1140 = vpop.f32.mrb[0].mxu0
    %v1141 = vpop.f32.mrb[0].mxu0
    %v1142 = vadd.f32 %v1022, %v1141
    %v1143 = vpop.f32.mrb[0].mxu0
    %1144 = vmatprep.mubr.bf16.mxu0 0
    %1145 = vmatmul.mubr.bf16.gmra.mrb[0].mxu0 %v1055
    %v1146 = vpop.f32.mrb[0].mxu0
    %v1147 = vadd.f32 %v1022, %v1146
    %v1148 = vpop.f32.mrb[0].mxu0
    %v1149 = vpop.f32.mrb[0].mxu0
    %v1150 = vadd.f32 %v1022, %v1149
    %v1151 = vpop.f32.mrb[0].mxu0
    %1152 = vmatprep.mubr.bf16.mxu0 0
    %1153 = vmatmul.mubr.bf16.gmra.mrb[0].mxu0 %v1058
    %v1154 = vpop.f32.mrb[0].mxu0
    %v1155 = vadd.f32 %v1022, %v1154
    %v1156 = vpop.f32.mrb[0].mxu0
    %v1157 = vpop.f32.mrb[0].mxu0
    %v1158 = vadd.f32 %v1022, %v1157
    %v1159 = vpop.f32.mrb[0].mxu0
    %1160 = vmatprep.mubr.bf16.mxu0 0
    %1161 = vmatmul.mubr.bf16.gmra.mrb[0].mxu0 %v1061
    %v1162 = vpop.f32.mrb[0].mxu0
    %v1163 = vadd.f32 %v1022, %v1162
    %v1164 = vpop.f32.mrb[0].mxu0
    %v1165 = vpop.f32.mrb[0].mxu0
    %v1166 = vadd.f32 %v1022, %v1165
    %v1167 = vpop.f32.mrb[0].mxu0
    %1168 = vmatprep.mubr.bf16.mxu0 0
    %1169 = vmatmul.mubr.bf16.gmra.mrb[0].mxu0 %v1064
    %v1170 = vpop.f32.mrb[0].mxu0
    %v1171 = vadd.f32 %v1022, %v1170
    %v1172 = vpop.f32.mrb[0].mxu0
    %v1173 = vpop.f32.mrb[0].mxu0
    %v1174 = vadd.f32 %v1022, %v1173
    %v1175 = vpop.f32.mrb[0].mxu0
    %1176 = vmatprep.mubr.bf16.mxu0 0
    %1177 = vmatmul.mubr.bf16.gmra.mrb[0].mxu0 %v1067
    %v1178 = vpop.f32.mrb[0].mxu0
    %v1179 = vadd.f32 %v1022, %v1178
    %v1180 = vpop.f32.mrb[0].mxu0
    %v1181 = vpop.f32.mrb[0].mxu0
    %v1182 = vadd.f32 %v1022, %v1181
    %v1183 = vpop.f32.mrb[0].mxu0
    %1184 = vmatprep.mubr.bf16.mxu0 0
    %1185 = vmatmul.mubr.bf16.gmra.mrb[0].mxu0 %v1070
    %v1186 = vpop.f32.mrb[0].mxu0
    %v1187 = vadd.f32 %v1022, %v1186
    %v1188 = vpop.f32.mrb[0].mxu0
    %v1189 = vpop.f32.mrb[0].mxu0
    %v1190 = vadd.f32 %v1022, %v1189
    %v1191 = vpop.f32.mrb[0].mxu0
    %1192 = vmatprep.mubr.bf16.mxu0 0
    %1193 = vmatmul.mubr.bf16.gmra.mrb[0].mxu0 %v1073
    %v1194 = vpop.f32.mrb[0].mxu0
    %v1195 = vadd.f32 %v1022, %v1194
    %v1196 = vpop.f32.mrb[0].mxu0
    %v1197 = vpop.f32.mrb[0].mxu0
    %v1198 = vadd.f32 %v1022, %v1197
    %v1199 = vpop.f32.mrb[0].mxu0
    %1200 = vmatprep.mubr.bf16.mxu0 0
    %1201 = vmatmul.mubr.bf16.gmra.mrb[0].mxu0 %v1076
    %v1202 = vpop.f32.mrb[0].mxu0
    %v1203 = vadd.f32 %v1022, %v1202
    %v1204 = vpop.f32.mrb[0].mxu0
    %v1205 = vpop.f32.mrb[0].mxu0
    %v1206 = vadd.f32 %v1022, %v1205
    %v1207 = vpop.f32.mrb[0].mxu0
    %1208 = vmatprep.mubr.bf16.mxu0 0
    %1209 = vmatmul.mubr.bf16.gmra.mrb[0].mxu0 %v1079
    %v1210 = vpop.f32.mrb[0].mxu0
    %v1211 = vadd.f32 %v1022, %v1210
    %v1212 = vpop.f32.mrb[0].mxu0
    %v1213 = vpop.f32.mrb[0].mxu0
    %v1214 = vadd.f32 %v1022, %v1213
    %v1215 = vpop.f32.mrb[0].mxu0
    %1216 = vmatprep.mubr.bf16.mxu0 0
    %1217 = vmatmul.mubr.bf16.gmra.mrb[0].mxu0 %v1082
    %v1218 = vpop.f32.mrb[0].mxu0
    %v1219 = vadd.f32 %v1022, %v1218
    %v1220 = vpop.f32.mrb[0].mxu0
    %v1221 = vpop.f32.mrb[0].mxu0
    %v1222 = vadd.f32 %v1022, %v1221
    %v1223 = vpop.f32.mrb[0].mxu0
    %1224 = vmatprep.mubr.bf16.mxu0 0
    %1225 = vmatmul.mubr.bf16.gmra.mrb[0].mxu0 %v1085
    %v1226 = vpop.f32.mrb[0].mxu0
    %v1227 = vadd.f32 %v1022, %v1226
    %v1228 = vpop.f32.mrb[0].mxu0
    %v1229 = vpop.f32.mrb[0].mxu0
    %v1230 = vadd.f32 %v1022, %v1229
    %v1231 = vpop.f32.mrb[0].mxu0
    %1232 = vmatprep.mubr.bf16.mxu0 0
    %1233 = vmatmul.mubr.bf16.gmra.mrb[0].mxu0 %v1088
    %v1234 = vpop.f32.mrb[0].mxu0
    %v1235 = vadd.f32 %v1022, %v1234
    %v1236 = vpop.f32.mrb[0].mxu0
    %v1237 = vpop.f32.mrb[0].mxu0
    %v1238 = vadd.f32 %v1022, %v1237
    %v1239 = vpop.f32.mrb[0].mxu0
    %1240 = vmatprep.mubr.bf16.mxu0 0
    %1241 = vmatmul.mubr.bf16.gmra.mrb[0].mxu0 %v1091
    %v1242 = vpop.f32.mrb[0].mxu0
    %v1243 = vadd.f32 %v1022, %v1242
    %v1244 = vpop.f32.mrb[0].mxu0
    %v1245 = vpop.f32.mrb[0].mxu0
    %v1246 = vadd.f32 %v1022, %v1245
    %v1247 = vpop.f32.mrb[0].mxu0
    %1248 = vmatprep.mubr.bf16.mxu0 0
    %1249 = vmatmul.mubr.bf16.gmra.mrb[0].mxu0 %v1094
    %v1250 = vpop.f32.mrb[0].mxu0
    %v1251 = vadd.f32 %v1022, %v1250
    %v1252 = vpop.f32.mrb[0].mxu0
    %v1253 = vpop.f32.mrb[0].mxu0
    %v1254 = vadd.f32 %v1022, %v1253
    %v1255 = vpop.f32.mrb[0].mxu0
    %1256 = vdwg.mxu0
    %v1257 = vmax.f32 %v1131, 0.0
    %v1258 = vmax.f32 %v1134, 0.0
    %v1259 = vmax.f32 %v1139, 0.0
    %v1260 = vmax.f32 %v1142, 0.0
    %v1261 = vmax.f32 %v1147, 0.0
    %v1262 = vmax.f32 %v1150, 0.0
    %v1263 = vmax.f32 %v1155, 0.0
    %v1264 = vmax.f32 %v1158, 0.0
    %v1265 = vmax.f32 %v1163, 0.0
    %v1266 = vmax.f32 %v1166, 0.0
    %v1267 = vmax.f32 %v1171, 0.0
    %v1268 = vmax.f32 %v1174, 0.0
    %v1269 = vmax.f32 %v1179, 0.0
    %v1270 = vmax.f32 %v1182, 0.0
    %v1271 = vmax.f32 %v1187, 0.0
    %v1272 = vmax.f32 %v1190, 0.0
    %v1273 = vmax.f32 %v1195, 0.0
    %v1274 = vmax.f32 %v1198, 0.0
    %v1275 = vmax.f32 %v1203, 0.0
    %v1276 = vmax.f32 %v1206, 0.0
    %v1277 = vmax.f32 %v1211, 0.0
    %v1278 = vmax.f32 %v1214, 0.0
    %v1279 = vmax.f32 %v1219, 0.0
    %v1280 = vmax.f32 %v1222, 0.0
    %v1281 = vmax.f32 %v1227, 0.0
    %v1282 = vmax.f32 %v1230, 0.0
    %v1283 = vmax.f32 %v1235, 0.0
    %v1284 = vmax.f32 %v1238, 0.0
    %v1285 = vmax.f32 %v1243, 0.0
    %v1286 = vmax.f32 %v1246, 0.0
    %v1287 = vmax.f32 %v1251, 0.0
    %v1288 = vmax.f32 %v1254, 0.0
    %v1289 = vadd.f32 %v1257, 1.0
    %v1290 = vadd.f32 %v1258, 1.0
    %v1291 = vadd.f32 %v1259, 1.0
    %v1292 = vadd.f32 %v1260, 1.0
    %v1293 = vadd.f32 %v1261, 1.0
    %v1294 = vadd.f32 %v1262, 1.0
    %v1295 = vadd.f32 %v1263, 1.0
    %v1296 = vadd.f32 %v1264, 1.0
    %v1297 = vadd.f32 %v1265, 1.0
    %v1298 = vadd.f32 %v1266, 1.0
    %v1299 = vadd.f32 %v1267, 1.0
    %v1300 = vadd.f32 %v1268, 1.0
    %v1301 = vadd.f32 %v1269, 1.0
    %v1302 = vadd.f32 %v1270, 1.0
    %v1303 = vadd.f32 %v1271, 1.0
    %v1304 = vadd.f32 %v1272, 1.0
    %v1305 = vadd.f32 %v1273, 1.0
    %v1306 = vadd.f32 %v1274, 1.0
    %v1307 = vadd.f32 %v1275, 1.0
    %v1308 = vadd.f32 %v1276, 1.0
    %v1309 = vadd.f32 %v1277, 1.0
    %v1310 = vadd.f32 %v1278, 1.0
    %v1311 = vadd.f32 %v1279, 1.0
    %v1312 = vadd.f32 %v1280, 1.0
    %v1313 = vadd.f32 %v1281, 1.0
    %v1314 = vadd.f32 %v1282, 1.0
    %v1315 = vadd.f32 %v1283, 1.0
    %v1316 = vadd.f32 %v1284, 1.0
    %v1317 = vadd.f32 %v1285, 1.0
    %v1318 = vadd.f32 %v1286, 1.0
    %v1319 = vadd.f32 %v1287, 1.0
    %v1320 = vadd.f32 %v1288, 1.0
    %1321 = vst [vmem:[#allocation2] sm:$0xff] %v1289
    %1322 = vst [vmem:[#allocation2 + $0x8] sm:$0xff] %v1290
    %1323 = vst [vmem:[#allocation2 + $0x10] sm:$0xff] %v1291
    %1324 = vst [vmem:[#allocation2 + $0x18] sm:$0xff] %v1292
    %1325 = vst [vmem:[#allocation2 + $0x20] sm:$0xff] %v1293
    %1326 = vst [vmem:[#allocation2 + $0x28] sm:$0xff] %v1294
    %1327 = vst [vmem:[#allocation2 + $0x30] sm:$0xff] %v1295
    %1328 = vst [vmem:[#allocation2 + $0x38] sm:$0xff] %v1296
    %1329 = vst [vmem:[#allocation2 + $0x40] sm:$0xff] %v1297
    %1330 = vst [vmem:[#allocation2 + $0x48] sm:$0xff] %v1298
    %1331 = vst [vmem:[#allocation2 + $0x50] sm:$0xff] %v1299
    %1332 = vst [vmem:[#allocation2 + $0x58] sm:$0xff] %v1300
    %1333 = vst [vmem:[#allocation2 + $0x60] sm:$0xff] %v1301
    %1334 = vst [vmem:[#allocation2 + $0x68] sm:$0xff] %v1302
    %1335 = vst [vmem:[#allocation2 + $0x70] sm:$0xff] %v1303
    %1336 = vst [vmem:[#allocation2 + $0x78] sm:$0xff] %v1304
    %1337 = vst [vmem:[#allocation2 + $0x80] sm:$0xff] %v1305
    %1338 = vst [vmem:[#allocation2 + $0x88] sm:$0xff] %v1306
    %1339 = vst [vmem:[#allocation2 + $0x90] sm:$0xff] %v1307
    %1340 = vst [vmem:[#allocation2 + $0x98] sm:$0xff] %v1308
    %1341 = vst [vmem:[#allocation2 + $0xa0] sm:$0xff] %v1309
    %1342 = vst [vmem:[#allocation2 + $0xa8] sm:$0xff] %v1310
    %1343 = vst [vmem:[#allocation2 + $0xb0] sm:$0xff] %v1311
    %1344 = vst [vmem:[#allocation2 + $0xb8] sm:$0xff] %v1312
    %1345 = vst [vmem:[#allocation2 + $0xc0] sm:$0xff] %v1313
    %1346 = vst [vmem:[#allocation2 + $0xc8] sm:$0xff] %v1314
    %1347 = vst [vmem:[#allocation2 + $0xd0] sm:$0xff] %v1315
    %1348 = vst [vmem:[#allocation2 + $0xd8] sm:$0xff] %v1316
    %1349 = vst [vmem:[#allocation2 + $0xe0] sm:$0xff] %v1317
    %1350 = vst [vmem:[#allocation2 + $0xe8] sm:$0xff] %v1318
    %1351 = vst [vmem:[#allocation2 + $0xf0] sm:$0xff] %v1319
    %1352 = vst [vmem:[#allocation2 + $0xf8] sm:$0xff] %v1320
    // Predicated region
    $region38: #{tpu_custom_call.1} parent=1 // pred_check
      _
    $region39: #{tpu_custom_call.1} parent=1 // pred_check_branch
      %1354 = sbr.rel (0) target = $region41
    $region40: #{tpu_custom_call.1} parent=1 // pred_region
      %s1356 = ssub.s32 4096, 4096
      %1357 = vsyncadd [#allocation3], %s1356
      %s1358 = sshll.u32 [#allocation2], 4
      %s1359 = int_to_ptr.vmem [resolvable:$true] %s1358
      %1364 = dma.vmem_to_hbm [thread:$0]  %s1359, 4096, %s9, [#allocation3], 128, 128, 8
    $region41: #{tpu_custom_call.1} parent=1 // pred_fallthru
      _
    // Predicated region
    $region42: #{tpu_custom_call.1} parent=1 // pred_check
      _
    $region43: #{tpu_custom_call.1} parent=1 // pred_check_branch
      %1366 = sbr.rel (0) target = $region45
    $region44: #{tpu_custom_call.1} parent=1 // pred_region
      %1367 = dma.done [#allocation3], 4096
    $region45: #{tpu_custom_call.1} parent=1 // pred_fallthru
      _
    %1368 = vsyncpa [#allocation3], 1

</llo_original>
